<compile_context>
chip_gen: v7x
topology: tpu7x:2x2x1
jax: 0.10.0
libtpu: 0.0.40
codegen_flags: <defaults>
</compile_context>

<pallas_src>
import jax
import jax.numpy as jnp
from jax.experimental import pallas as pl
from jax.experimental.pallas import tpu as pltpu


def _scale_kernel(scale_ref, x_ref, o_ref):
    # scale_ref: SMEM (1,) f32 parameter; x_ref/o_ref: VMEM tiles.
    s = scale_ref[0]
    o_ref[...] = (s * x_ref[...].astype(jnp.float32)).astype(o_ref.dtype)


def scales_forward(x, scale, *, target_tile_rows=1024):
    """Apply out = scale * x.  `x` has any shape, `scale` is shape (1,)."""
    orig_shape = x.shape
    orig_dtype = x.dtype
    total = x.size
    itemsize = jnp.dtype(orig_dtype).itemsize

    # Widest lane width that divides the flat size -> avoids any padding pass.
    lanes = None
    for cand in (1024, 512, 256, 128):
        if total % cand == 0:
            lanes = cand
            break
    if lanes is None:
        lanes = 128
        padded = pl.cdiv(total, lanes) * lanes  # minimal pad (< 128 elements)
    else:
        padded = total

    x_flat = x.reshape(-1)
    if padded != total:
        x_flat = jnp.pad(x_flat, (0, padded - total))

    rows = padded // lanes
    x2d = x_flat.reshape(rows, lanes)

    # Dtype-aware sublane multiple (sub-32-bit dtypes pack along sublanes).
    sub_mult = 8 * max(1, 4 // itemsize)  # 8 f32 / 16 bf16 / 32 int8
    tile_rows = min(target_tile_rows, rows)

    # For big slabs, keep >= 4 grid steps so v7x's 2 TensorCores both get work.
    if rows * lanes * itemsize >= (4 << 20):
        cap = max(sub_mult, (pl.cdiv(rows, 4) // sub_mult) * sub_mult)
        tile_rows = min(tile_rows, cap)

    if tile_rows < rows:
        # Keep partial-block masking confined to the final block only.
        tile_rows = max(sub_mult, (tile_rows // sub_mult) * sub_mult)

    grid = (pl.cdiv(rows, tile_rows),)

    cost = pl.CostEstimate(
        flops=total, transcendentals=0, bytes_accessed=2 * x.nbytes)

    out2d = pl.pallas_call(
        _scale_kernel,
        out_shape=jax.ShapeDtypeStruct((rows, lanes), orig_dtype),
        grid_spec=pltpu.PrefetchScalarGridSpec(
            num_scalar_prefetch=0,
            grid=grid,
            in_specs=[
                pl.BlockSpec(memory_space=pltpu.SMEM),              # scale (1,) f32
                pl.BlockSpec((tile_rows, lanes), lambda i: (i, 0)),  # x slab
            ],
            out_specs=pl.BlockSpec((tile_rows, lanes), lambda i: (i, 0)),
        ),
        compiler_params=pltpu.CompilerParams(
            dimension_semantics=("parallel",)),
        cost_estimate=cost,
    )(scale.astype(jnp.float32), x2d)

    out_flat = out2d.reshape(-1)
    if padded != total:
        out_flat = out_flat[:total]
    return out_flat.reshape(orig_shape)


if __name__ == "__main__":
    key = jax.random.PRNGKey(0)

    # Example input consistent with FCOS regression head outputs (NCHW).
    x = jax.random.normal(key, (2, 4, 16, 16), dtype=jnp.float32)

    # Default init matching nn.Parameter(torch.tensor([1.0])).
    scale_default = jnp.array([1.0], dtype=jnp.float32)
    out = jax.block_until_ready(scales_forward(x, scale_default))
    ref = scale_default[0] * x
    assert out.shape == x.shape and out.dtype == x.dtype
    assert jnp.allclose(out, ref, atol=1e-6, rtol=1e-6)

    # Non-trivial learned scale value.
    scale_learned = jnp.array([0.75], dtype=jnp.float32)
    out2 = jax.block_until_ready(scales_forward(x, scale_learned))
    ref2 = scale_learned[0] * x
    assert jnp.allclose(out2, ref2, atol=1e-6, rtol=1e-6)

    # Odd-sized input (exercises the minimal-pad / ragged path).
    x_odd = jax.random.normal(jax.random.PRNGKey(1), (1, 3, 7, 9),
                              dtype=jnp.float32)
    out3 = jax.block_until_ready(scales_forward(x_odd, scale_learned))
    ref3 = scale_learned[0] * x_odd
    assert out3.shape == x_odd.shape
    assert jnp.allclose(out3, ref3, atol=1e-6, rtol=1e-6)

    print("KERNEL_OK")
</pallas_src>

<mosaic_0001>
module attributes {stable_mosaic.version = 11 : i64} {
  func.func @_scale_kernel(%arg0: i32, %arg1: memref<1xf32, #tpu.memory_space<smem>>, %arg2: memref<2x1024xf32, #tpu.memory_space<vmem>>, %arg3: memref<2x1024xf32, #tpu.memory_space<vmem>>) attributes {dimension_semantics = [#tpu.dimension_semantics<parallel>], iteration_bounds = array<i64: 1>, scalar_prefetch = 0 : i64, scratch_operands = 0 : i64, tpu.core_type = #tpu.core_type<tc>, window_params = [{transform_indices = @transform_0, window_bounds = array<i64: 1>}, {transform_indices = @transform_1, window_bounds = array<i64: 2, 1024>}, {transform_indices = @transform_2, window_bounds = array<i64: 2, 1024>}]} {
    %c0 = arith.constant 0 : index
    %0 = memref.load %arg1[%c0] : memref<1xf32, #tpu.memory_space<smem>>
    %c0_0 = arith.constant 0 : index
    %c0_1 = arith.constant 0 : index
    %1 = vector.load %arg2[%c0_0, %c0_1] : memref<2x1024xf32, #tpu.memory_space<vmem>>, vector<2x1024xf32>
    %2 = vector.broadcast %0 : f32 to vector<2x1024xf32>
    %3 = arith.mulf %2, %1 : vector<2x1024xf32>
    %c0_2 = arith.constant 0 : index
    %c0_3 = arith.constant 0 : index
    %4 = vector.load %arg3[%c0_2, %c0_3] : memref<2x1024xf32, #tpu.memory_space<vmem>>, vector<2x1024xf32>
    tpu.vector_store %arg3[%c0_2, %c0_3], %3 {strides = array<i32>} : memref<2x1024xf32, #tpu.memory_space<vmem>>, vector<2x1024xf32>,
    return
  }
  func.func @transform_0(%arg0: i32) -> i32 {
    %c0_i32 = arith.constant 0 : i32
    %c0_i32_0 = arith.constant 0 : i32
    return %c0_i32 : i32
  }
  func.func @transform_1(%arg0: i32) -> (i32, i32) {
    %c0_i32 = arith.constant 0 : i32
    %c0_i32_0 = arith.constant 0 : i32
    return %arg0, %c0_i32 : i32, i32
  }
  func.func @transform_2(%arg0: i32) -> (i32, i32) {
    %c0_i32 = arith.constant 0 : i32
    %c0_i32_0 = arith.constant 0 : i32
    return %arg0, %c0_i32 : i32, i32
  }
}

</mosaic_0001>

<llo_original>
// kernel: tpu_custom_call.1
$region0: #{tpu_custom_call.1}
  #allocation0 [shape = 'u32[]', space=smem, size = 0x4, offset = 0x4, fixed_abs, tag = 'smem constant byte address 0x4 - core index']
  #allocation1 [shape = 'u32[144,128]{1,0:T(1,128)}', space=vmem, size = 0x12000, scoped, tag = 'internal scratch']
  #allocation2 [shape = 'f32[1]{0:T(128)S(6)}', space=smem, size = 0x200, scoped, tag = 'scoped memory for tpu_custom_call.1']
  %s0 = inlined_call_operand.<no memory space> [shape: f32[1], index: 0, kind: input, shape index: {}]
  %s1 = inlined_call_operand.hbm [shape: f32[2,1024], index: 1, kind: input, shape index: {}]
  %s2 = inlined_call_operand.hbm [shape: f32[2,1024], index: 2, kind: output, shape index: {}]
  %s3 = sld [smem:[#allocation0]]
  $region22: #{tpu_custom_call.1} parent=0
    _
  %s5 = ssub.s32 1, %s3
  %s6 = scalar_select 0, %s5, %s3
  %7 = sst [smem:[#allocation2]] %s0
  $region1: #{tpu_custom_call.1} parent=0
    #allocation3 [shape = 'u8[8192]{0}', space=vmem, size = 0x2000, scoped, tag = 'input window, operand 1, single buffered']
    #allocation4 [shape = 's32[1]{0}', space=sflag, size = 0x4, scoped, tag = 'scoped memory for tpu_custom_call.1']
    #allocation5 [shape = 's32[1]{0}', space=sflag, size = 0x4, scoped, tag = 'scoped memory for tpu_custom_call.1']
    #allocation6 [shape = 'u8[8192]{0}', space=vmem, size = 0x2000, scoped, tag = 'output window, operand 0, single buffered']
    %8 = vsyncpa [#allocation4], 0
    %9 = vsyncpa [#allocation5], 0
    // Predicated region
    $region2: #{tpu_custom_call.1} parent=1 // pred_check
      _
    $region3: #{tpu_custom_call.1} parent=1 // pred_check_branch
      %11 = sbr.rel (0) target = $region5
    $region4: #{tpu_custom_call.1} parent=1 // pred_region
      _
    $region5: #{tpu_custom_call.1} parent=1 // pred_fallthru
      _
    // Predicated region
    $region6: #{tpu_custom_call.1} parent=1 // pred_check
      _
    $region7: #{tpu_custom_call.1} parent=1 // pred_check_branch
      %13 = sbr.rel (0) target = $region9
    $region8: #{tpu_custom_call.1} parent=1 // pred_region
      %s15 = ssub.s32 256, 256
      %16 = vsyncadd [#allocation4], %s15
      %s18 = sshll.u32 [#allocation3], 4
      %s19 = int_to_ptr.vmem [resolvable:$true] %s18
      %21 = dma.hbm_to_vmem [thread:$0]  %s1, 256, %s19, [#allocation4]
    $region9: #{tpu_custom_call.1} parent=1 // pred_fallthru
      _
    // Predicated region
    $region10: #{tpu_custom_call.1} parent=1 // pred_check
      _
    $region11: #{tpu_custom_call.1} parent=1 // pred_check_branch
      %23 = sbr.rel (0) target = $region13
    $region12: #{tpu_custom_call.1} parent=1 // pred_region
      %24 = dma.done [#allocation4], 256
    $region13: #{tpu_custom_call.1} parent=1 // pred_fallthru
      _
    %s25 = sld [smem:[#allocation2]]
    %v26 = vld [vmem:[#allocation3] sm:$0xff]
    %v27 = vld [vmem:[#allocation3 + $0x8] sm:$0xff]
    %v28 = vstv %s25
    %v29 = vmul.f32 %v28, %v26
    %v30 = vmul.f32 %v28, %v27
    %31 = vst [vmem:[#allocation6] sm:$0xff] %v29
    %32 = vst [vmem:[#allocation6 + $0x8] sm:$0xff] %v30
    // Predicated region
    $region14: #{tpu_custom_call.1} parent=1 // pred_check
      _
    $region15: #{tpu_custom_call.1} parent=1 // pred_check_branch
      %34 = sbr.rel (0) target = $region17
    $region16: #{tpu_custom_call.1} parent=1 // pred_region
      %s36 = ssub.s32 256, 256
      %37 = vsyncadd [#allocation5], %s36
      %s39 = sshll.u32 [#allocation6], 4
      %s40 = int_to_ptr.vmem [resolvable:$true] %s39
      %42 = dma.vmem_to_hbm [thread:$0]  %s40, 256, %s2, [#allocation5]
    $region17: #{tpu_custom_call.1} parent=1 // pred_fallthru
      _
    // Predicated region
    $region18: #{tpu_custom_call.1} parent=1 // pred_check
      _
    $region19: #{tpu_custom_call.1} parent=1 // pred_check_branch
      %44 = sbr.rel (0) target = $region21
    $region20: #{tpu_custom_call.1} parent=1 // pred_region
      %45 = dma.done [#allocation5], 256
    $region21: #{tpu_custom_call.1} parent=1 // pred_fallthru
      _
    %46 = vsyncpa [#allocation4], 1
    %47 = vsyncpa [#allocation5], 1

</llo_original>
